<compile_context>
chip_gen: v7x
topology: tpu7x:2x2x1
jax: 0.10.0
libtpu: 0.0.40
codegen_flags: <defaults>
</compile_context>

<pallas_src>
import functools

import jax
import jax.numpy as jnp
from jax import lax
from jax.experimental import pallas as pl
from jax.experimental.pallas import tpu as pltpu


# ----------------------------- Pallas kernels -------------------------------
def _conv_stats_kernel(xp_ref, wbig_ref, conv_ref, stats_ref):
    """Pass 1: 3x3 'same' conv of B images as 3 lane-aligned MXU dots + BN stats.

    xp_ref   : (B, H+2, (W+2)*Cin)   padded images, rows flattened to lanes
    wbig_ref : (3, (W+2)*Cin, W*Cout) per-dy weights with the dx shift baked in
    conv_ref : (B, H, W*Cout)         conv output, NHWC-contiguous per row
    stats_ref: (1, 2, W*Cout)         per-block [sum ; sum-of-squares]
    """
    b, hp2, l = xp_ref.shape
    h = hp2 - 2
    acc = None
    for dy in range(3):                                   # unrolled at trace time
        patch = xp_ref[:, dy:dy + h, :].reshape(b * h, l)  # M = B*H sublane rows
        part = jnp.dot(patch, wbig_ref[dy], preferred_element_type=jnp.float32)
        acc = part if acc is None else acc + part
    conv_ref[...] = acc.reshape(conv_ref.shape)
    stats_ref[0] = jnp.concatenate(
        [jnp.sum(acc, axis=0, keepdims=True),
         jnp.sum(acc * acc, axis=0, keepdims=True)], axis=0)


def _bn_prelu_kernel(conv_ref, scale_ref, shift_ref, alpha_ref, out_ref):
    """Pass 2: folded BN affine (one FMA) + PReLU; pure elementwise VPU stream."""
    y = conv_ref[...] * scale_ref[...] + shift_ref[...]    # broadcast (1, W*Cout)
    alpha = alpha_ref[0]                                    # SMEM scalar slope
    out_ref[...] = jnp.maximum(y, 0.0) + alpha * jnp.minimum(y, 0.0)


# ------------------------------ glue (JAX) ----------------------------------
def _largest_divisor_at_most(n, cap):
    best = 1
    for d in range(1, n + 1):
        if n % d == 0 and d <= cap:
            best = d
    return best


def depth_to_space_nhwc(x, block_size=2):
    # TODO(synk): DepthToSpace is not defined in the provided snippet; this is
    # the TF-style (DCR) ordering (matches the common NCHW view/permute port).
    # PyTorch nn.PixelShuffle is CRD; they coincide when out_channels // 4 == 1.
    n, h, w, c = x.shape
    bs = block_size
    cp = c // (bs * bs)
    x = x.reshape(n, h, w, bs, bs, cp)
    x = jnp.transpose(x, (0, 1, 3, 2, 4, 5))
    return x.reshape(n, h * bs, w * bs, cp)


@functools.partial(jax.jit, static_argnames=("compute_dtype",))
def conv_block_cat(x_nchw, w_oihw, bias, gamma, beta, alpha,
                   compute_dtype=jnp.float32):
    del bias  # conv bias cancels exactly under train-mode BN mean subtraction
    n, cin, h, w = x_nchw.shape
    cout = w_oihw.shape[0]
    assert w_oihw.shape == (cout, cin, 3, 3)
    assert cout % 4 == 0, "DepthToSpace(block=2) needs out_channels % 4 == 0"
    eps = 0.01
    wpad = w + 2
    lpad = wpad * cin                 # padded-row lane width
    wcout = w * cout                  # output lane width

    # --- layout prep (pure data movement, done once) -------------------------
    # NCHW -> NHWC -> pad H/W by 1 -> flatten each padded row to (W+2)*Cin lanes
    # so the in-kernel conv is 3 plain lane-aligned sublane-offset dots.
    x_nhwc = jnp.transpose(x_nchw, (0, 2, 3, 1)).astype(jnp.float32)
    xp = jnp.pad(x_nhwc, ((0, 0), (1, 1), (1, 1), (0, 0)))
    xp = xp.reshape(n, h + 2, lpad).astype(compute_dtype)

    # Per-dy weights with the dx shift baked in:
    #   wbig[dy] = sum_dx kron(Shift_dx, w[:, :, dy, dx].T), (3, (W+2)*Cin, W*Cout)
    # where Shift_dx[(W+2), W] has ones at row == col + dx.
    taps = []
    for dy in range(3):
        m = jnp.zeros((lpad, wcout), jnp.float32)
        for dx in range(3):
            shift = jnp.eye(wpad, w, k=-dx, dtype=jnp.float32)
            m = m + jnp.kron(shift, w_oihw[:, :, dy, dx].astype(jnp.float32).T)
        taps.append(m)
    wbig = jnp.stack(taps).astype(compute_dtype)

    cparams = pltpu.CompilerParams(
        dimension_semantics=("parallel",),      # per-block work is independent
        vmem_limit_bytes=48 * 1024 * 1024,      # safe on v5e/v6e (128 MiB) & v7x (64 MiB)
    )

    # Images per grid step: fill the MXU M dimension (target ~256 rows).
    b1 = _largest_divisor_at_most(n, max(1, 256 // max(h, 1)))
    xp_spec = pl.BlockSpec((b1, h + 2, lpad), lambda i: (i, 0, 0))
    wb_spec = pl.BlockSpec((3, lpad, wcout), lambda i: (0, 0, 0))

    # ---- pass 1: conv (3 aligned MXU dots) + merged per-block BN stats ------
    conv, stats = pl.pallas_call(
        _conv_stats_kernel,
        out_shape=(jax.ShapeDtypeStruct((n, h, wcout), jnp.float32),
                   jax.ShapeDtypeStruct((n // b1, 2, wcout), jnp.float32)),
        grid_spec=pltpu.PrefetchScalarGridSpec(
            num_scalar_prefetch=0,
            grid=(n // b1,),
            in_specs=[xp_spec, wb_spec],
            out_specs=[pl.BlockSpec((b1, h, wcout), lambda i: (i, 0, 0)),
                       pl.BlockSpec((1, 2, wcout), lambda i: (i, 0, 0))]),
        compiler_params=cparams,
    )(xp, wbig)

    # ---- tiny cross-block combine + folded BN affine (pure XLA, O(N/B*W*C)) --
    cnt = jnp.float32(n * h * w)
    ch_sum = jnp.sum(stats[:, 0, :].reshape(-1, w, cout), axis=(0, 1))
    ch_sq = jnp.sum(stats[:, 1, :].reshape(-1, w, cout), axis=(0, 1))
    mean = ch_sum / cnt
    var = jnp.maximum(ch_sq / cnt - mean * mean, 0.0)     # biased, train-mode BN
    scale = gamma.astype(jnp.float32) * lax.rsqrt(var + eps)
    shift = beta.astype(jnp.float32) - mean * scale
    scale_vec = jnp.tile(scale, w).reshape(1, wcout)      # lane layout w*Cout+co
    shift_vec = jnp.tile(shift, w).reshape(1, wcout)
    alpha_arr = jnp.asarray(alpha, jnp.float32).reshape(1)

    # ---- pass 2: elementwise folded BN + PReLU, in-place over the conv buffer
    b2 = _largest_divisor_at_most(n, max(1, 1024 // max(h, 1)))
    out2d = pl.pallas_call(
        _bn_prelu_kernel,
        out_shape=jax.ShapeDtypeStruct((n, h, wcout), jnp.float32),
        grid_spec=pltpu.PrefetchScalarGridSpec(
            num_scalar_prefetch=0,
            grid=(n // b2,),
            in_specs=[pl.BlockSpec((b2, h, wcout), lambda i: (i, 0, 0)),
                      pl.BlockSpec((1, wcout), lambda i: (0, 0)),
                      pl.BlockSpec((1, wcout), lambda i: (0, 0)),
                      pl.BlockSpec(memory_space=pltpu.MemorySpace.SMEM)],
            out_specs=pl.BlockSpec((b2, h, wcout), lambda i: (i, 0, 0))),
        compiler_params=cparams,
        input_output_aliases={0: 0},             # reuse the conv buffer in place
    )(conv, scale_vec, shift_vec, alpha_arr)

    # Output is NHWC-contiguous: the reshape is free, depth-to-space is one shuffle.
    y_nhwc = out2d.reshape(n, h, w, cout)
    up = depth_to_space_nhwc(y_nhwc, block_size=2)        # (n, 2h, 2w, cout//4)
    return jnp.transpose(up, (0, 3, 1, 2))                # NCHW


# -------------------------------- reference ---------------------------------
def depth_to_space_nchw(x, block_size=2):
    n, c, h, w = x.shape
    bs = block_size
    x = x.reshape(n, bs, bs, c // (bs * bs), h, w)
    x = jnp.transpose(x, (0, 3, 4, 1, 5, 2))
    return x.reshape(n, c // (bs * bs), h * bs, w * bs)


def reference(x_nchw, w_oihw, bias, gamma, beta, alpha):
    conv = lax.conv_general_dilated(
        x_nchw.astype(jnp.float32), w_oihw.astype(jnp.float32),
        window_strides=(1, 1), padding="SAME",
        dimension_numbers=("NCHW", "OIHW", "NCHW"),
    ) + bias[None, :, None, None]
    mean = jnp.mean(conv, axis=(0, 2, 3), keepdims=True)
    var = jnp.var(conv, axis=(0, 2, 3), keepdims=True)    # biased, train-mode BN
    bn = gamma[None, :, None, None] * (conv - mean) / jnp.sqrt(var + 0.01) \
        + beta[None, :, None, None]
    act = jnp.maximum(bn, 0.0) + alpha * jnp.minimum(bn, 0.0)
    return depth_to_space_nchw(act, block_size=2)


# ---------------------------------- main -------------------------------------
if __name__ == "__main__":
    in_channel = 4     # conv: 2*in_channel -> in_channel; DepthToSpace needs in_channel % 4 == 0
    N, H, W = 2, 16, 16
    key = jax.random.PRNGKey(0)
    kx, kw = jax.random.split(key)

    x = jax.random.normal(kx, (N, 2 * in_channel, H, W), dtype=jnp.float32)

    # Deterministic parameter init matching the module's __init__:
    # xavier_uniform_ conv weight, zero bias, PReLU slope 0, BN gamma=1 / beta=0.
    fan_in = 2 * in_channel * 3 * 3
    fan_out = in_channel * 3 * 3
    bound = (6.0 / (fan_in + fan_out)) ** 0.5
    w = jax.random.uniform(kw, (in_channel, 2 * in_channel, 3, 3),
                           minval=-bound, maxval=bound, dtype=jnp.float32)
    bias = jnp.zeros((in_channel,), jnp.float32)
    gamma = jnp.ones((in_channel,), jnp.float32)
    beta = jnp.zeros((in_channel,), jnp.float32)
    alpha = jnp.float32(0.0)

    out = conv_block_cat(x, w, bias, gamma, beta, alpha)
    out = jax.block_until_ready(out)

    ref = jax.block_until_ready(reference(x, w, bias, gamma, beta, alpha))
    assert out.shape == (N, in_channel // 4, 2 * H, 2 * W), out.shape
    err = float(jnp.max(jnp.abs(out - ref)))
    assert jnp.allclose(out, ref, atol=1e-4, rtol=1e-4), err

    print("KERNEL_OK")
</pallas_src>

<mosaic_0001>
module attributes {stable_mosaic.version = 11 : i64} {
  func.func @_conv_stats_kernel(%arg0: i32, %arg1: memref<2x18x144xf32, #tpu.memory_space<vmem>>, %arg2: memref<3x144x64xf32, #tpu.memory_space<vmem>>, %arg3: memref<2x16x64xf32, #tpu.memory_space<vmem>>, %arg4: memref<1x2x64xf32, #tpu.memory_space<vmem>>) attributes {dimension_semantics = [#tpu.dimension_semantics<parallel>], iteration_bounds = array<i64: 1>, scalar_prefetch = 0 : i64, scratch_operands = 0 : i64, tpu.core_type = #tpu.core_type<tc>, window_params = [{transform_indices = @transform_0, window_bounds = array<i64: 2, 18, 144>}, {pipeline_mode = #tpu.pipeline_mode<synchronous>, transform_indices = @transform_1, window_bounds = array<i64: 3, 144, 64>}, {transform_indices = @transform_2, window_bounds = array<i64: 2, 16, 64>}, {transform_indices = @transform_3, window_bounds = array<i64: 1, 2, 64>}]} {
    %c0 = arith.constant 0 : index
    %c0_0 = arith.constant 0 : index
    %c0_1 = arith.constant 0 : index
    %0 = vector.load %arg1[%c0, %c0_0, %c0_1] : memref<2x18x144xf32, #tpu.memory_space<vmem>>, vector<2x16x144xf32>
    %1 = vector.shape_cast %0 : vector<2x16x144xf32> to vector<32x144xf32>
    %c0_2 = arith.constant 0 : index
    %c0_3 = arith.constant 0 : index
    %c0_4 = arith.constant 0 : index
    %2 = vector.load %arg2[%c0_2, %c0_3, %c0_4] : memref<3x144x64xf32, #tpu.memory_space<vmem>>, vector<1x144x64xf32>
    %3 = vector.shape_cast %2 : vector<1x144x64xf32> to vector<144x64xf32>
    %cst = arith.constant dense<0.000000e+00> : vector<32x64xf32>
    %4 = tpu.matmul %1, %3, %cst {dimension_numbers = #tpu.dot_dimension_numbers<[1], [0], [0], [1], [0, 0, 1, 1], [], []>} : vector<32x144xf32>, vector<144x64xf32>, vector<32x64xf32> -> vector<32x64xf32>
    %c0_5 = arith.constant 0 : index
    %c1 = arith.constant 1 : index
    %c0_6 = arith.constant 0 : index
    %5 = vector.load %arg1[%c0_5, %c1, %c0_6] : memref<2x18x144xf32, #tpu.memory_space<vmem>>, vector<2x16x144xf32>
    %6 = vector.shape_cast %5 : vector<2x16x144xf32> to vector<32x144xf32>
    %c1_7 = arith.constant 1 : index
    %c0_8 = arith.constant 0 : index
    %c0_9 = arith.constant 0 : index
    %7 = vector.load %arg2[%c1_7, %c0_8, %c0_9] : memref<3x144x64xf32, #tpu.memory_space<vmem>>, vector<1x144x64xf32>
    %8 = vector.shape_cast %7 : vector<1x144x64xf32> to vector<144x64xf32>
    %cst_10 = arith.constant dense<0.000000e+00> : vector<32x64xf32>
    %9 = tpu.matmul %6, %8, %cst_10 {dimension_numbers = #tpu.dot_dimension_numbers<[1], [0], [0], [1], [0, 0, 1, 1], [], []>} : vector<32x144xf32>, vector<144x64xf32>, vector<32x64xf32> -> vector<32x64xf32>
    %10 = arith.addf %4, %9 : vector<32x64xf32>
    %c0_11 = arith.constant 0 : index
    %c2 = arith.constant 2 : index
    %c0_12 = arith.constant 0 : index
    %11 = vector.load %arg1[%c0_11, %c2, %c0_12] : memref<2x18x144xf32, #tpu.memory_space<vmem>>, vector<2x16x144xf32>
    %12 = vector.shape_cast %11 : vector<2x16x144xf32> to vector<32x144xf32>
    %c2_13 = arith.constant 2 : index
    %c0_14 = arith.constant 0 : index
    %c0_15 = arith.constant 0 : index
    %13 = vector.load %arg2[%c2_13, %c0_14, %c0_15] : memref<3x144x64xf32, #tpu.memory_space<vmem>>, vector<1x144x64xf32>
    %14 = vector.shape_cast %13 : vector<1x144x64xf32> to vector<144x64xf32>
    %cst_16 = arith.constant dense<0.000000e+00> : vector<32x64xf32>
    %15 = tpu.matmul %12, %14, %cst_16 {dimension_numbers = #tpu.dot_dimension_numbers<[1], [0], [0], [1], [0, 0, 1, 1], [], []>} : vector<32x144xf32>, vector<144x64xf32>, vector<32x64xf32> -> vector<32x64xf32>
    %16 = arith.addf %10, %15 : vector<32x64xf32>
    %17 = vector.shape_cast %16 : vector<32x64xf32> to vector<2x16x64xf32>
    %c0_17 = arith.constant 0 : index
    %c0_18 = arith.constant 0 : index
    %c0_19 = arith.constant 0 : index
    %18 = vector.load %arg3[%c0_17, %c0_18, %c0_19] : memref<2x16x64xf32, #tpu.memory_space<vmem>>, vector<2x16x64xf32>
    tpu.vector_store %arg3[%c0_17, %c0_18, %c0_19], %17 {strides = array<i32>} : memref<2x16x64xf32, #tpu.memory_space<vmem>>, vector<2x16x64xf32>,
    %cst_20 = arith.constant dense<0.000000e+00> : vector<64xf32>
    %19 = vector.multi_reduction <add>, %16, %cst_20 [0] : vector<32x64xf32> to vector<64xf32>
    %20 = vector.shape_cast %19 : vector<64xf32> to vector<1x64xf32>
    %21 = arith.mulf %16, %16 : vector<32x64xf32>
    %cst_21 = arith.constant dense<0.000000e+00> : vector<64xf32>
    %22 = vector.multi_reduction <add>, %21, %cst_21 [0] : vector<32x64xf32> to vector<64xf32>
    %23 = vector.shape_cast %22 : vector<64xf32> to vector<1x64xf32>
    %24 = tpu.concatenate %20, %23 in 0 : vector<1x64xf32>, vector<1x64xf32> -> vector<2x64xf32>
    %c0_22 = arith.constant 0 : index
    %c0_23 = arith.constant 0 : index
    %c0_24 = arith.constant 0 : index
    %25 = vector.load %arg4[%c0_22, %c0_23, %c0_24] : memref<1x2x64xf32, #tpu.memory_space<vmem>>, vector<1x2x64xf32>
    %26 = vector.shape_cast %25 : vector<1x2x64xf32> to vector<2x64xf32>
    %27 = vector.shape_cast %24 : vector<2x64xf32> to vector<1x2x64xf32>
    tpu.vector_store %arg4[%c0_22, %c0_23, %c0_24], %27 {strides = array<i32>} : memref<1x2x64xf32, #tpu.memory_space<vmem>>, vector<1x2x64xf32>,
    return
  }
  func.func @transform_0(%arg0: i32) -> (i32, i32, i32) {
    %c0_i32 = arith.constant 0 : i32
    %c0_i32_0 = arith.constant 0 : i32
    %c0_i32_1 = arith.constant 0 : i32
    return %arg0, %c0_i32, %c0_i32_0 : i32, i32, i32
  }
  func.func @transform_1(%arg0: i32) -> (i32, i32, i32) {
    %c0_i32 = arith.constant 0 : i32
    %c0_i32_0 = arith.constant 0 : i32
    %c0_i32_1 = arith.constant 0 : i32
    %c0_i32_2 = arith.constant 0 : i32
    return %c0_i32, %c0_i32_0, %c0_i32_1 : i32, i32, i32
  }
  func.func @transform_2(%arg0: i32) -> (i32, i32, i32) {
    %c0_i32 = arith.constant 0 : i32
    %c0_i32_0 = arith.constant 0 : i32
    %c0_i32_1 = arith.constant 0 : i32
    return %arg0, %c0_i32, %c0_i32_0 : i32, i32, i32
  }
  func.func @transform_3(%arg0: i32) -> (i32, i32, i32) {
    %c0_i32 = arith.constant 0 : i32
    %c0_i32_0 = arith.constant 0 : i32
    %c0_i32_1 = arith.constant 0 : i32
    return %arg0, %c0_i32, %c0_i32_0 : i32, i32, i32
  }
}

module attributes {stable_mosaic.version = 11 : i64} {
  func.func @_bn_prelu_kernel(%arg0: i32, %arg1: memref<2x16x64xf32, #tpu.memory_space<vmem>>, %arg2: memref<1x64xf32, #tpu.memory_space<vmem>>, %arg3: memref<1x64xf32, #tpu.memory_space<vmem>>, %arg4: memref<1xf32, #tpu.memory_space<smem>>, %arg5: memref<2x16x64xf32, #tpu.memory_space<vmem>>) attributes {dimension_semantics = [#tpu.dimension_semantics<parallel>], iteration_bounds = array<i64: 1>, scalar_prefetch = 0 : i64, scratch_operands = 0 : i64, tpu.core_type = #tpu.core_type<tc>, window_params = [{transform_indices = @transform_0, window_bounds = array<i64: 2, 16, 64>}, {pipeline_mode = #tpu.pipeline_mode<synchronous>, transform_indices = @transform_1, window_bounds = array<i64: 1, 64>}, {pipeline_mode = #tpu.pipeline_mode<synchronous>, transform_indices = @transform_2, window_bounds = array<i64: 1, 64>}, {transform_indices = @transform_3, window_bounds = array<i64: 1>}, {transform_indices = @transform_4, window_bounds = array<i64: 2, 16, 64>}]} {
    %c0 = arith.constant 0 : index
    %c0_0 = arith.constant 0 : index
    %c0_1 = arith.constant 0 : index
    %0 = vector.load %arg1[%c0, %c0_0, %c0_1] : memref<2x16x64xf32, #tpu.memory_space<vmem>>, vector<2x16x64xf32>
    %c0_2 = arith.constant 0 : index
    %c0_3 = arith.constant 0 : index
    %1 = vector.load %arg2[%c0_2, %c0_3] : memref<1x64xf32, #tpu.memory_space<vmem>>, vector<1x64xf32>
    %2 = vector.shape_cast %1 : vector<1x64xf32> to vector<1x1x64xf32>
    %3 = vector.broadcast %2 : vector<1x1x64xf32> to vector<2x16x64xf32>
    %4 = arith.mulf %0, %3 : vector<2x16x64xf32>
    %c0_4 = arith.constant 0 : index
    %c0_5 = arith.constant 0 : index
    %5 = vector.load %arg3[%c0_4, %c0_5] : memref<1x64xf32, #tpu.memory_space<vmem>>, vector<1x64xf32>
    %6 = vector.shape_cast %5 : vector<1x64xf32> to vector<1x1x64xf32>
    %7 = vector.broadcast %6 : vector<1x1x64xf32> to vector<2x16x64xf32>
    %8 = arith.addf %4, %7 : vector<2x16x64xf32>
    %c0_6 = arith.constant 0 : index
    %9 = memref.load %arg4[%c0_6] : memref<1xf32, #tpu.memory_space<smem>>
    %cst = arith.constant 0.000000e+00 : f32
    %10 = vector.broadcast %cst : f32 to vector<2x16x64xf32>
    %11 = arith.maximumf %8, %10 : vector<2x16x64xf32>
    %cst_7 = arith.constant 0.000000e+00 : f32
    %12 = vector.broadcast %cst_7 : f32 to vector<2x16x64xf32>
    %13 = arith.minimumf %8, %12 : vector<2x16x64xf32>
    %14 = vector.broadcast %9 : f32 to vector<2x16x64xf32>
    %15 = arith.mulf %14, %13 : vector<2x16x64xf32>
    %16 = arith.addf %11, %15 : vector<2x16x64xf32>
    %c0_8 = arith.constant 0 : index
    %c0_9 = arith.constant 0 : index
    %c0_10 = arith.constant 0 : index
    %17 = vector.load %arg5[%c0_8, %c0_9, %c0_10] : memref<2x16x64xf32, #tpu.memory_space<vmem>>, vector<2x16x64xf32>
    tpu.vector_store %arg5[%c0_8, %c0_9, %c0_10], %16 {strides = array<i32>} : memref<2x16x64xf32, #tpu.memory_space<vmem>>, vector<2x16x64xf32>,
    return
  }
  func.func @transform_0(%arg0: i32) -> (i32, i32, i32) {
    %c0_i32 = arith.constant 0 : i32
    %c0_i32_0 = arith.constant 0 : i32
    %c0_i32_1 = arith.constant 0 : i32
    return %arg0, %c0_i32, %c0_i32_0 : i32, i32, i32
  }
  func.func @transform_1(%arg0: i32) -> (i32, i32) {
    %c0_i32 = arith.constant 0 : i32
    %c0_i32_0 = arith.constant 0 : i32
    %c0_i32_1 = arith.constant 0 : i32
    return %c0_i32, %c0_i32_0 : i32, i32
  }
  func.func @transform_2(%arg0: i32) -> (i32, i32) {
    %c0_i32 = arith.constant 0 : i32
    %c0_i32_0 = arith.constant 0 : i32
    %c0_i32_1 = arith.constant 0 : i32
    return %c0_i32, %c0_i32_0 : i32, i32
  }
  func.func @transform_3(%arg0: i32) -> i32 {
    %c0_i32 = arith.constant 0 : i32
    %c0_i32_0 = arith.constant 0 : i32
    return %c0_i32 : i32
  }
  func.func @transform_4(%arg0: i32) -> (i32, i32, i32) {
    %c0_i32 = arith.constant 0 : i32
    %c0_i32_0 = arith.constant 0 : i32
    %c0_i32_1 = arith.constant 0 : i32
    return %arg0, %c0_i32, %c0_i32_0 : i32, i32, i32
  }
}

</mosaic_0001>

<llo_original>
// kernel: squeeze.21
$region0: #{squeeze.21}
  %s0 = inlined_call_operand.vmem [shape: f32[64], index: 0, kind: input, shape index: {}]
  %s1 = inlined_call_operand.vmem [shape: f32[16,4], index: 1, kind: output, shape index: {}]
  $region1: #{squeeze.21} parent=0
    #allocation0 [shape = 'u8[4096]{0}', space=vmem, size = 0x1000, scoped, tag = 'scoped mem for input reshape']
    %s3 = sshllo.u32 0, 1
    %v4 = vld [vmem:[%s0] sm:%s3]
    %5 = vst [vmem:[#allocation0] sm:%s3] %v4
    %v6 = vld [vmem:[#allocation0] sm:$0x1]
    %vm7 = vcmask 31744
    %8 = vst.msk [vmem:[%s1] sm:$0x1] %vm7, %v6
    %v9 = vld [vmem:[#allocation0] sm:$0x1]
    %10 = vrot.lane.b32.xlu0 %v9, 124
    %v11 = vpop.permute.xlu0 %10
    %vm12 = vcmask 31744
    %s13 = scalar_lea.vmem %s1, 1
    %14 = vst.msk [vmem:[%s13] sm:$0x1] %vm12, %v11
    %v15 = vld [vmem:[#allocation0] sm:$0x1]
    %16 = vrot.lane.b32.xlu0 %v15, 120
    %v17 = vpop.permute.xlu0 %16
    %vm18 = vcmask 31744
    %s19 = scalar_lea.vmem %s1, 2
    %20 = vst.msk [vmem:[%s19] sm:$0x1] %vm18, %v17
    %v21 = vld [vmem:[#allocation0] sm:$0x1]
    %22 = vrot.lane.b32.xlu0 %v21, 116
    %v23 = vpop.permute.xlu0 %22
    %vm24 = vcmask 31744
    %s25 = scalar_lea.vmem %s1, 3
    %26 = vst.msk [vmem:[%s25] sm:$0x1] %vm24, %v23
    %v27 = vld [vmem:[#allocation0] sm:$0x1]
    %28 = vrot.lane.b32.xlu0 %v27, 112
    %v29 = vpop.permute.xlu0 %28
    %vm30 = vcmask 31744
    %s31 = scalar_lea.vmem %s1, 4
    %32 = vst.msk [vmem:[%s31] sm:$0x1] %vm30, %v29
    %v33 = vld [vmem:[#allocation0] sm:$0x1]
    %34 = vrot.lane.b32.xlu0 %v33, 108
    %v35 = vpop.permute.xlu0 %34
    %vm36 = vcmask 31744
    %s37 = scalar_lea.vmem %s1, 5
    %38 = vst.msk [vmem:[%s37] sm:$0x1] %vm36, %v35
    %v39 = vld [vmem:[#allocation0] sm:$0x1]
    %40 = vrot.lane.b32.xlu0 %v39, 104
    %v41 = vpop.permute.xlu0 %40
    %vm42 = vcmask 31744
    %s43 = scalar_lea.vmem %s1, 6
    %44 = vst.msk [vmem:[%s43] sm:$0x1] %vm42, %v41
    %v45 = vld [vmem:[#allocation0] sm:$0x1]
    %46 = vrot.lane.b32.xlu0 %v45, 100
    %v47 = vpop.permute.xlu0 %46
    %vm48 = vcmask 31744
    %s49 = scalar_lea.vmem %s1, 7
    %50 = vst.msk [vmem:[%s49] sm:$0x1] %vm48, %v47
    %v51 = vld [vmem:[#allocation0] sm:$0x1]
    %52 = vrot.lane.b32.xlu0 %v51, 96
    %v53 = vpop.permute.xlu0 %52
    %vm54 = vcmask 31744
    %s55 = scalar_lea.vmem %s1, 8
    %56 = vst.msk [vmem:[%s55] sm:$0x1] %vm54, %v53
    %v57 = vld [vmem:[#allocation0] sm:$0x1]
    %58 = vrot.lane.b32.xlu0 %v57, 92
    %v59 = vpop.permute.xlu0 %58
    %vm60 = vcmask 31744
    %s61 = scalar_lea.vmem %s1, 9
    %62 = vst.msk [vmem:[%s61] sm:$0x1] %vm60, %v59
    %v63 = vld [vmem:[#allocation0] sm:$0x1]
    %64 = vrot.lane.b32.xlu0 %v63, 88
    %v65 = vpop.permute.xlu0 %64
    %vm66 = vcmask 31744
    %s67 = scalar_lea.vmem %s1, 10
    %68 = vst.msk [vmem:[%s67] sm:$0x1] %vm66, %v65
    %v69 = vld [vmem:[#allocation0] sm:$0x1]
    %70 = vrot.lane.b32.xlu0 %v69, 84
    %v71 = vpop.permute.xlu0 %70
    %vm72 = vcmask 31744
    %s73 = scalar_lea.vmem %s1, 11
    %74 = vst.msk [vmem:[%s73] sm:$0x1] %vm72, %v71
    %v75 = vld [vmem:[#allocation0] sm:$0x1]
    %76 = vrot.lane.b32.xlu0 %v75, 80
    %v77 = vpop.permute.xlu0 %76
    %vm78 = vcmask 31744
    %s79 = scalar_lea.vmem %s1, 12
    %80 = vst.msk [vmem:[%s79] sm:$0x1] %vm78, %v77
    %v81 = vld [vmem:[#allocation0] sm:$0x1]
    %82 = vrot.lane.b32.xlu0 %v81, 76
    %v83 = vpop.permute.xlu0 %82
    %vm84 = vcmask 31744
    %s85 = scalar_lea.vmem %s1, 13
    %86 = vst.msk [vmem:[%s85] sm:$0x1] %vm84, %v83
    %v87 = vld [vmem:[#allocation0] sm:$0x1]
    %88 = vrot.lane.b32.xlu0 %v87, 72
    %v89 = vpop.permute.xlu0 %88
    %vm90 = vcmask 31744
    %s91 = scalar_lea.vmem %s1, 14
    %92 = vst.msk [vmem:[%s91] sm:$0x1] %vm90, %v89
    %v93 = vld [vmem:[#allocation0] sm:$0x1]
    %94 = vrot.lane.b32.xlu0 %v93, 68
    %v95 = vpop.permute.xlu0 %94
    %vm96 = vcmask 31744
    %s97 = scalar_lea.vmem %s1, 15
    %98 = vst.msk [vmem:[%s97] sm:$0x1] %vm96, %v95

// kernel: tile.13
$region0: #{tile.13}
  #allocation0 [shape = 's32[1]{0}', space=sflag, size = 0x4, scoped, tag = 'scoped memory for tile.13']
  %s0 = inlined_call_operand.vmem [shape: f32[4], index: 0, kind: input, shape index: {}]
  %s1 = inlined_call_operand.vmem [shape: f32[16,4], index: 1, kind: output, shape index: {}]
  // Predicated region
  $region2: #{tile.13} parent=0 // pred_check
    _
  $region3: #{tile.13} parent=0 // pred_check_branch
    %3 = sbr.rel (0) target = $region5
  $region4: #{tile.13} parent=0 // pred_region
    _
  $region5: #{tile.13} parent=0 // pred_fallthru
    _
  %v4 = vld [vmem:[%s0] ss:$0 sm:$0xff]
  %5 = vst [vmem:[%s1] sm:$0xff] %v4
  %s6 = scalar_lea.vmem %s1, 8
  %7 = vst [vmem:[%s6] sm:$0xff] %v4

// kernel: tile.14
$region0: #{tile.14}
  %s0 = inlined_call_operand.vmem [shape: f32[16,4], index: 0, kind: input, shape index: {}]
  %s1 = inlined_call_operand.vmem [shape: f32[1,64], index: 1, kind: output, shape index: {}]
  $region1: #{tile.14} parent=0
    #allocation0 [shape = 'u8[4096]{0}', space=vmem, size = 0x1000, scoped, tag = 'scoped mem for output reshape']
    %v2 = vld [vmem:[%s0] sm:$0x1]
    %vm3 = vcmask 31744
    %4 = vst.msk [vmem:[#allocation0] sm:$0x1] %vm3, %v2
    %s5 = scalar_lea.vmem %s0, 15
    %v6 = vld [vmem:[%s5] sm:$0x1]
    %7 = vrot.lane.b32.xlu0 %v6, 60
    %v8 = vpop.permute.xlu0 %7
    %vm9 = vcmask 523744
    %10 = vst.msk [vmem:[#allocation0] sm:$0x1] %vm9, %v8
    %s11 = scalar_lea.vmem %s0, 14
    %v12 = vld [vmem:[%s11] sm:$0x1]
    %13 = vrot.lane.b32.xlu0 %v12, 56
    %v14 = vpop.permute.xlu0 %13
    %vm15 = vcmask 490944
    %16 = vst.msk [vmem:[#allocation0] sm:$0x1] %vm15, %v14
    %s17 = scalar_lea.vmem %s0, 13
    %v18 = vld [vmem:[%s17] sm:$0x1]
    %19 = vrot.lane.b32.xlu0 %v18, 52
    %v20 = vpop.permute.xlu0 %19
    %vm21 = vcmask 458144
    %22 = vst.msk [vmem:[#allocation0] sm:$0x1] %vm21, %v20
    %s23 = scalar_lea.vmem %s0, 12
    %v24 = vld [vmem:[%s23] sm:$0x1]
    %25 = vrot.lane.b32.xlu0 %v24, 48
    %v26 = vpop.permute.xlu0 %25
    %vm27 = vcmask 425344
    %28 = vst.msk [vmem:[#allocation0] sm:$0x1] %vm27, %v26
    %s29 = scalar_lea.vmem %s0, 11
    %v30 = vld [vmem:[%s29] sm:$0x1]
    %31 = vrot.lane.b32.xlu0 %v30, 44
    %v32 = vpop.permute.xlu0 %31
    %vm33 = vcmask 392544
    %34 = vst.msk [vmem:[#allocation0] sm:$0x1] %vm33, %v32
    %s35 = scalar_lea.vmem %s0, 10
    %v36 = vld [vmem:[%s35] sm:$0x1]
    %37 = vrot.lane.b32.xlu0 %v36, 40
    %v38 = vpop.permute.xlu0 %37
    %vm39 = vcmask 359744
    %40 = vst.msk [vmem:[#allocation0] sm:$0x1] %vm39, %v38
    %s41 = scalar_lea.vmem %s0, 9
    %v42 = vld [vmem:[%s41] sm:$0x1]
    %43 = vrot.lane.b32.xlu0 %v42, 36
    %v44 = vpop.permute.xlu0 %43
    %vm45 = vcmask 326944
    %46 = vst.msk [vmem:[#allocation0] sm:$0x1] %vm45, %v44
    %s47 = scalar_lea.vmem %s0, 8
    %v48 = vld [vmem:[%s47] sm:$0x1]
    %49 = vrot.lane.b32.xlu0 %v48, 32
    %v50 = vpop.permute.xlu0 %49
    %vm51 = vcmask 294144
    %52 = vst.msk [vmem:[#allocation0] sm:$0x1] %vm51, %v50
    %s53 = scalar_lea.vmem %s0, 7
    %v54 = vld [vmem:[%s53] sm:$0x1]
    %55 = vrot.lane.b32.xlu0 %v54, 28
    %v56 = vpop.permute.xlu0 %55
    %vm57 = vcmask 261344
    %58 = vst.msk [vmem:[#allocation0] sm:$0x1] %vm57, %v56
    %s59 = scalar_lea.vmem %s0, 6
    %v60 = vld [vmem:[%s59] sm:$0x1]
    %61 = vrot.lane.b32.xlu0 %v60, 24
    %v62 = vpop.permute.xlu0 %61
    %vm63 = vcmask 228544
    %64 = vst.msk [vmem:[#allocation0] sm:$0x1] %vm63, %v62
    %s65 = scalar_lea.vmem %s0, 5
    %v66 = vld [vmem:[%s65] sm:$0x1]
    %67 = vrot.lane.b32.xlu0 %v66, 20
    %v68 = vpop.permute.xlu0 %67
    %vm69 = vcmask 195744
    %70 = vst.msk [vmem:[#allocation0] sm:$0x1] %vm69, %v68
    %s71 = scalar_lea.vmem %s0, 4
    %v72 = vld [vmem:[%s71] sm:$0x1]
    %73 = vrot.lane.b32.xlu0 %v72, 16
    %v74 = vpop.permute.xlu0 %73
    %vm75 = vcmask 162944
    %76 = vst.msk [vmem:[#allocation0] sm:$0x1] %vm75, %v74
    %s77 = scalar_lea.vmem %s0, 3
    %v78 = vld [vmem:[%s77] sm:$0x1]
    %79 = vrot.lane.b32.xlu0 %v78, 12
    %v80 = vpop.permute.xlu0 %79
    %vm81 = vcmask 130144
    %82 = vst.msk [vmem:[#allocation0] sm:$0x1] %vm81, %v80
    %s83 = scalar_lea.vmem %s0, 2
    %v84 = vld [vmem:[%s83] sm:$0x1]
    %85 = vrot.lane.b32.xlu0 %v84, 8
    %v86 = vpop.permute.xlu0 %85
    %vm87 = vcmask 97344
    %88 = vst.msk [vmem:[#allocation0] sm:$0x1] %vm87, %v86
    %s89 = scalar_lea.vmem %s0, 1
    %v90 = vld [vmem:[%s89] sm:$0x1]
    %91 = vrot.lane.b32.xlu0 %v90, 4
    %v92 = vpop.permute.xlu0 %91
    %vm93 = vcmask 64544
    %94 = vst.msk [vmem:[#allocation0] sm:$0x1] %vm93, %v92
    %s96 = sshllo.u32 0, 1
    %v98 = vld [vmem:[#allocation0] sm:%s96]
    %s99 = sshllo.u32 0, 1
    %100 = vst [vmem:[%s1] sm:%s99] %v98

// kernel: conv_block_cat.3
$region0: #{conv_block_cat.3}
  #allocation0 [shape = 'u32[]', space=smem, size = 0x4, offset = 0x4, fixed_abs, tag = 'smem constant byte address 0x4 - core index']
  #allocation1 [shape = 'u32[144,128]{1,0:T(1,128)}', space=vmem, size = 0x12000, scoped, tag = 'internal scratch']
  #allocation2 [shape = 'f32[1]{0:T(128)S(6)}', space=smem, size = 0x200, scoped, tag = 'scoped memory for conv_block_cat.3']
  %s0 = inlined_call_operand.vmem [shape: f32[2,16,64], index: 0, kind: input, shape index: {}, may-alias: {0,4}]
  %s1 = inlined_call_operand.vmem [shape: f32[1,64], index: 1, kind: input, shape index: {}]
  %s2 = inlined_call_operand.vmem [shape: f32[1,64], index: 2, kind: input, shape index: {}]
  %s3 = inlined_call_operand.<no memory space> [shape: f32[1], index: 3, kind: input, shape index: {}]
  %s4 = inlined_call_operand.vmem [shape: f32[2,16,64], index: 4, kind: output, shape index: {}, may-alias: {0,4}]
  %s5 = sld [smem:[#allocation0]]
  $region26: #{conv_block_cat.3} parent=0
    _
  %s7 = ssub.s32 1, %s5
  %s8 = scalar_select 0, %s7, %s5
  %9 = sst [smem:[#allocation2]] %s3
  // Predicated region
  $region2: #{conv_block_cat.3} parent=0 // pred_check
    _
  $region3: #{conv_block_cat.3} parent=0 // pred_check_branch
    %11 = sbr.rel (0) target = $region5
  $region4: #{conv_block_cat.3} parent=0 // pred_region
    _
  $region5: #{conv_block_cat.3} parent=0 // pred_fallthru
    _
  // Predicated region
  $region6: #{conv_block_cat.3} parent=0 // pred_check
    _
  $region7: #{conv_block_cat.3} parent=0 // pred_check_branch
    %13 = sbr.rel (0) target = $region9
  $region8: #{conv_block_cat.3} parent=0 // pred_region
    _
  $region9: #{conv_block_cat.3} parent=0 // pred_fallthru
    _
  // Predicated region
  $region10: #{conv_block_cat.3} parent=0 // pred_check
    _
  $region11: #{conv_block_cat.3} parent=0 // pred_check_branch
    %15 = sbr.rel (0) target = $region13
  $region12: #{conv_block_cat.3} parent=0 // pred_region
    _
  $region13: #{conv_block_cat.3} parent=0 // pred_fallthru
    _
  // Predicated region
  $region14: #{conv_block_cat.3} parent=0 // pred_check
    _
  $region15: #{conv_block_cat.3} parent=0 // pred_check_branch
    %17 = sbr.rel (0) target = $region17
  $region16: #{conv_block_cat.3} parent=0 // pred_region
    _
  $region17: #{conv_block_cat.3} parent=0 // pred_fallthru
    _
  %v18 = vld [vmem:[%s0] sm:$0xff]
  %v19 = vld [vmem:[%s0 + $0x8] sm:$0xff]
  %v20 = vld [vmem:[%s0 + $0x10] sm:$0xff]
  %v21 = vld [vmem:[%s0 + $0x18] sm:$0xff]
  %v22 = vld [vmem:[%s1] sm:$0x1]
  %v24 = vlaneseq
  %v25 = vshrl.u32 %v24, 7
  %v26 = vsub.s32 0, %v25
  %v27 = vrot.slane %v22, %v26
  %v29 = vmul.f32 %v18, %v27
  %v30 = vmul.f32 %v19, %v27
  %v31 = vmul.f32 %v20, %v27
  %v32 = vmul.f32 %v21, %v27
  %v33 = vld [vmem:[%s2] sm:$0x1]
  %v35 = vlaneseq
  %v36 = vshrl.u32 %v35, 7
  %v37 = vsub.s32 0, %v36
  %v38 = vrot.slane %v33, %v37
  %v40 = vadd.f32 %v29, %v38
  %v41 = vadd.f32 %v30, %v38
  %v42 = vadd.f32 %v31, %v38
  %v43 = vadd.f32 %v32, %v38
  %s44 = sld [smem:[#allocation2]]
  %v45 = vmax.f32 %v40, 0.0
  %v46 = vmax.f32 %v41, 0.0
  %v47 = vmax.f32 %v42, 0.0
  %v48 = vmax.f32 %v43, 0.0
  %v49 = vmin.f32 %v40, 0.0
  %v50 = vmin.f32 %v41, 0.0
  %v51 = vmin.f32 %v42, 0.0
  %v52 = vmin.f32 %v43, 0.0
  %v53 = vstv %s44
  %v54 = vmul.f32 %v53, %v49
  %v55 = vmul.f32 %v53, %v50
  %v56 = vmul.f32 %v53, %v51
  %v57 = vmul.f32 %v53, %v52
  %v58 = vadd.f32 %v45, %v54
  %v59 = vadd.f32 %v46, %v55
  %v60 = vadd.f32 %v47, %v56
  %v61 = vadd.f32 %v48, %v57
  %vm62 = vcmask 523264
  %63 = vst.msk [vmem:[%s4] sm:$0xff] %vm62, %v58
  %64 = vst.msk [vmem:[%s4 + $0x8] sm:$0xff] %vm62, %v59
  %65 = vst.msk [vmem:[%s4 + $0x10] sm:$0xff] %vm62, %v60
  %66 = vst.msk [vmem:[%s4 + $0x18] sm:$0xff] %vm62, %v61
  // Predicated region
  $region18: #{conv_block_cat.3} parent=0 // pred_check
    _
  $region19: #{conv_block_cat.3} parent=0 // pred_check_branch
    %68 = sbr.rel (0) target = $region21
  $region20: #{conv_block_cat.3} parent=0 // pred_region
    _
  $region21: #{conv_block_cat.3} parent=0 // pred_fallthru
    _
  // Predicated region
  $region22: #{conv_block_cat.3} parent=0 // pred_check
    _
  $region23: #{conv_block_cat.3} parent=0 // pred_check_branch
    %70 = sbr.rel (0) target = $region25
  $region24: #{conv_block_cat.3} parent=0 // pred_region
    _
  $region25: #{conv_block_cat.3} parent=0 // pred_fallthru
    _

// kernel: conv_block_cat.2
$region0: #{conv_block_cat.2}
  #allocation0 [shape = 'u32[]', space=smem, size = 0x4, offset = 0x4, fixed_abs, tag = 'smem constant byte address 0x4 - core index']
  #allocation1 [shape = 'u32[144,128]{1,0:T(1,128)}', space=vmem, size = 0x12000, scoped, tag = 'internal scratch']
  %s0 = inlined_call_operand.vmem [shape: f32[2,18,144], index: 0, kind: input, shape index: {}]
  %s1 = inlined_call_operand.vmem [shape: f32[3,144,64], index: 1, kind: input, shape index: {}]
  %s2 = inlined_call_operand.vmem [shape: f32[2,16,64], index: 2, kind: output, shape index: {0}]
  %s3 = inlined_call_operand.vmem [shape: f32[1,2,64], index: 3, kind: output, shape index: {1}]
  %4 = xla_tuple %s2, %s3
  %s5 = sld [smem:[#allocation0]]
  $region26: #{conv_block_cat.2} parent=0
    _
  %s7 = ssub.s32 1, %s5
  %s8 = scalar_select 0, %s7, %s5
  // Predicated region
  $region2: #{conv_block_cat.2} parent=0 // pred_check
    _
  $region3: #{conv_block_cat.2} parent=0 // pred_check_branch
    %10 = sbr.rel (0) target = $region5
  $region4: #{conv_block_cat.2} parent=0 // pred_region
    _
  $region5: #{conv_block_cat.2} parent=0 // pred_fallthru
    _
  // Predicated region
  $region6: #{conv_block_cat.2} parent=0 // pred_check
    _
  $region7: #{conv_block_cat.2} parent=0 // pred_check_branch
    %12 = sbr.rel (0) target = $region9
  $region8: #{conv_block_cat.2} parent=0 // pred_region
    _
  $region9: #{conv_block_cat.2} parent=0 // pred_fallthru
    _
  %v13 = vld [vmem:[%s0] sm:$0xff]
  %v14 = vld [vmem:[%s0 + $0x8] sm:$0xff]
  %v15 = vld [vmem:[%s0 + $0x10] sm:$0xff]
  %v16 = vld [vmem:[%s0 + $0x18] sm:$0xff]
  %v17 = vld [vmem:[%s0 + $0x30] sm:$0xff]
  %v18 = vld [vmem:[%s0 + $0x38] sm:$0xff]
  %v19 = vld [vmem:[%s0 + $0x40] sm:$0xff]
  %v20 = vld [vmem:[%s0 + $0x48] sm:$0xff]
  %v21 = vld [vmem:[%s1] sm:$0xff]
  %v22 = vld [vmem:[%s1 + $0x8] sm:$0xff]
  %v23 = vld [vmem:[%s1 + $0x10] sm:$0xff]
  %v24 = vld [vmem:[%s1 + $0x18] sm:$0xff]
  %v25 = vld [vmem:[%s1 + $0x20] sm:$0xff]
  %v26 = vld [vmem:[%s1 + $0x28] sm:$0xff]
  %v27 = vld [vmem:[%s1 + $0x30] sm:$0xff]
  %v28 = vld [vmem:[%s1 + $0x38] sm:$0xff]
  %v29 = vld [vmem:[%s1 + $0x40] sm:$0xff]
  %v30 = vld [vmem:[%s1 + $0x48] sm:$0xff]
  %v31 = vld [vmem:[%s1 + $0x50] sm:$0xff]
  %v32 = vld [vmem:[%s1 + $0x58] sm:$0xff]
  %v33 = vld [vmem:[%s1 + $0x60] sm:$0xff]
  %v34 = vld [vmem:[%s1 + $0x68] sm:$0xff]
  %v35 = vld [vmem:[%s1 + $0x70] sm:$0xff]
  %v36 = vld [vmem:[%s1 + $0x78] sm:$0xff]
  %v37 = vld [vmem:[%s1 + $0x80] sm:$0xff]
  %v38 = vld [vmem:[%s1 + $0x88] sm:$0xff]
  %v39 = vld [vmem:[%s0] sm:$0xfe]
  %v40 = vld [vmem:[%s0 + $0x8] sm:$0xfe]
  %v41 = vld [vmem:[%s0 + $0x20] sm:$0x1]
  %v42 = vld [vmem:[%s0 + $0x28] sm:$0x1]
  %v43 = vld [vmem:[%s0 + $0x30] sm:$0xfe]
  %v44 = vld [vmem:[%s0 + $0x38] sm:$0xfe]
  %v45 = vld [vmem:[%s0 + $0x50] sm:$0x1]
  %v46 = vld [vmem:[%s0 + $0x58] sm:$0x1]
  %vm59 = vcmask 1046528
  %v60 = vrot.slane %v39, 1
  %v61 = vrot.slane %v15, 1
  %v62 = vsel %vm59, %v60, %v61
  %v63 = vrot.slane %v40, 1
  %v64 = vrot.slane %v16, 1
  %v65 = vsel %vm59, %v63, %v64
  %v66 = vrot.slane %v41, 1
  %v67 = vsel %vm59, %v61, %v66
  %v68 = vrot.slane %v42, 1
  %v69 = vsel %vm59, %v64, %v68
  %v70 = vrot.slane %v43, 1
  %v71 = vrot.slane %v19, 1
  %v72 = vsel %vm59, %v70, %v71
  %v73 = vrot.slane %v44, 1
  %v74 = vrot.slane %v20, 1
  %v75 = vsel %vm59, %v73, %v74
  %v76 = vrot.slane %v45, 1
  %v77 = vsel %vm59, %v71, %v76
  %v78 = vrot.slane %v46, 1
  %v79 = vsel %vm59, %v74, %v78
  %s84 = scalar_lea.vmem %s1, 144
  %v85 = vld [vmem:[%s84] sm:$0xff]
  %v86 = vld [vmem:[%s84 + $0x8] sm:$0xff]
  %v87 = vld [vmem:[%s84 + $0x10] sm:$0xff]
  %v88 = vld [vmem:[%s84 + $0x18] sm:$0xff]
  %v89 = vld [vmem:[%s84 + $0x20] sm:$0xff]
  %v90 = vld [vmem:[%s84 + $0x28] sm:$0xff]
  %v91 = vld [vmem:[%s84 + $0x30] sm:$0xff]
  %v92 = vld [vmem:[%s84 + $0x38] sm:$0xff]
  %v93 = vld [vmem:[%s84 + $0x40] sm:$0xff]
  %v94 = vld [vmem:[%s84 + $0x48] sm:$0xff]
  %v95 = vld [vmem:[%s84 + $0x50] sm:$0xff]
  %v96 = vld [vmem:[%s84 + $0x58] sm:$0xff]
  %v97 = vld [vmem:[%s84 + $0x60] sm:$0xff]
  %v98 = vld [vmem:[%s84 + $0x68] sm:$0xff]
  %v99 = vld [vmem:[%s84 + $0x70] sm:$0xff]
  %v100 = vld [vmem:[%s84 + $0x78] sm:$0xff]
  %v101 = vld [vmem:[%s84 + $0x80] sm:$0xff]
  %v102 = vld [vmem:[%s84 + $0x88] sm:$0xff]
  %vm103 = vcmask 130048
  %v104 = vsel %vm103, %v65, 0
  %v106 = vsel %vm103, %v69, 0
  %v108 = vsel %vm103, %v75, 0
  %v110 = vsel %vm103, %v79, 0
  %112 = vmatprep.subr.mxu0 0.0
  %113 = vmatpush1.msra.mxu0 %v85
  %114 = vmatprep.subr.mxu0 0.0
  %115 = vmatpush1.msra.mxu0 %v86
  %116 = vmatprep.subr.mxu0 0.0
  %117 = vmatpush1.msra.mxu0 %v87
  %118 = vmatprep.subr.mxu0 0.0
  %119 = vmatpush1.msra.mxu0 %v88
  %120 = vmatprep.subr.mxu0 0.0
  %121 = vmatpush1.msra.mxu0 %v89
  %122 = vmatprep.subr.mxu0 0.0
  %123 = vmatpush1.msra.mxu0 %v90
  %124 = vmatprep.subr.mxu0 0.0
  %125 = vmatpush1.msra.mxu0 %v91
  %126 = vmatprep.subr.mxu0 0.0
  %127 = vmatpush1.msra.mxu0 %v92
  %128 = vmatprep.subr.mxu0 0.0
  %129 = vmatpush1.msra.mxu0 %v93
  %130 = vmatprep.subr.mxu0 0.0
  %131 = vmatpush1.msra.mxu0 %v94
  %132 = vmatprep.subr.mxu0 0.0
  %133 = vmatpush1.msra.mxu0 %v95
  %134 = vmatprep.subr.mxu0 0.0
  %135 = vmatpush1.msra.mxu0 %v96
  %136 = vmatprep.subr.mxu0 0.0
  %137 = vmatpush1.msra.mxu0 %v97
  %138 = vmatprep.subr.mxu0 0.0
  %139 = vmatpush1.msra.mxu0 %v98
  %140 = vmatprep.subr.mxu0 0.0
  %141 = vmatpush1.msra.mxu0 %v99
  %142 = vmatprep.subr.mxu0 0.0
  %143 = vmatpush1.msra.mxu0 %v100
  %144 = vmatprep.subr.mxu0 0.0
  %145 = vmatpush1.msra.mxu0 %v101
  %146 = vmatprep.subr.mxu0 0.0
  %147 = vmatpush1.msra.mxu0 %v102
  %148 = vmatprep.subr.mxu0 0.0
  %149 = vmatpush1.msra.mxu0 0.0
  %150 = vmatprep.subr.mxu0 0.0
  %151 = vmatpush1.msra.mxu0 0.0
  %152 = vmatprep.subr.mxu0 0.0
  %153 = vmatpush1.msra.mxu0 0.0
  %154 = vmatprep.subr.mxu0 0.0
  %155 = vmatpush1.msra.mxu0 0.0
  %156 = vmatprep.subr.mxu0 0.0
  %157 = vmatpush1.msra.mxu0 0.0
  %158 = vmatprep.subr.mxu0 0.0
  %159 = vmatpush1.msra.mxu0 0.0
  %160 = vmatprep.subr.mxu0 0.0
  %161 = vmatpush1.msra.mxu0 0.0
  %162 = vmatprep.subr.mxu0 0.0
  %163 = vmatpush1.msra.mxu0 0.0
  %164 = vmatprep.subr.mxu0 0.0
  %165 = vmatpush1.msra.mxu0 0.0
  %166 = vmatprep.subr.mxu0 0.0
  %167 = vmatpush1.msra.mxu0 0.0
  %168 = vmatprep.subr.mxu0 0.0
  %169 = vmatpush1.msra.mxu0 0.0
  %170 = vmatprep.subr.mxu0 0.0
  %171 = vmatpush1.msra.mxu0 0.0
  %172 = vmatprep.subr.mxu0 0.0
  %173 = vmatpush1.msra.mxu0 0.0
  %174 = vmatprep.subr.mxu0 0.0
  %175 = vmatpush1.msra.mxu0 0.0
  %176 = vmatprep.mubr.f32.mxu0 %v104
  %177 = vmatmul.mubr.f32.gmra.mrb[0].mxu0 %v62
  %v178 = vpop.f32.mrb[0].mxu0
  %v179 = vadd.f32 0.0, %v178
  %v180 = vpop.f32.mrb[0].mxu0
  %181 = vmatprep.mubr.f32.mxu0 %v106
  %182 = vmatmul.mubr.f32.gmra.mrb[0].mxu0 %v67
  %v183 = vpop.f32.mrb[0].mxu0
  %v184 = vadd.f32 0.0, %v183
  %v185 = vpop.f32.mrb[0].mxu0
  %186 = vmatprep.mubr.f32.mxu0 %v108
  %187 = vmatmul.mubr.f32.gmra.mrb[0].mxu0 %v72
  %v188 = vpop.f32.mrb[0].mxu0
  %v189 = vadd.f32 0.0, %v188
  %v190 = vpop.f32.mrb[0].mxu0
  %191 = vmatprep.mubr.f32.mxu0 %v110
  %192 = vmatmul.mubr.f32.gmra.mrb[0].mxu0 %v77
  %v193 = vpop.f32.mrb[0].mxu0
  %v194 = vadd.f32 0.0, %v193
  %v195 = vpop.f32.mrb[0].mxu0
  %196 = vdwg.mxu0
  %v198 = vsel %vm103, %v14, 0
  %v200 = vsel %vm103, %v16, 0
  %v203 = vsel %vm103, %v18, 0
  %v205 = vsel %vm103, %v20, 0
  %207 = vmatprep.subr.mxu0 0.0
  %208 = vmatpush1.msra.mxu0 %v21
  %209 = vmatprep.subr.mxu0 0.0
  %210 = vmatpush1.msra.mxu0 %v22
  %211 = vmatprep.subr.mxu0 0.0
  %212 = vmatpush1.msra.mxu0 %v23
  %213 = vmatprep.subr.mxu0 0.0
  %214 = vmatpush1.msra.mxu0 %v24
  %215 = vmatprep.subr.mxu0 0.0
  %216 = vmatpush1.msra.mxu0 %v25
  %217 = vmatprep.subr.mxu0 0.0
  %218 = vmatpush1.msra.mxu0 %v26
  %219 = vmatprep.subr.mxu0 0.0
  %220 = vmatpush1.msra.mxu0 %v27
  %221 = vmatprep.subr.mxu0 0.0
  %222 = vmatpush1.msra.mxu0 %v28
  %223 = vmatprep.subr.mxu0 0.0
  %224 = vmatpush1.msra.mxu0 %v29
  %225 = vmatprep.subr.mxu0 0.0
  %226 = vmatpush1.msra.mxu0 %v30
  %227 = vmatprep.subr.mxu0 0.0
  %228 = vmatpush1.msra.mxu0 %v31
  %229 = vmatprep.subr.mxu0 0.0
  %230 = vmatpush1.msra.mxu0 %v32
  %231 = vmatprep.subr.mxu0 0.0
  %232 = vmatpush1.msra.mxu0 %v33
  %233 = vmatprep.subr.mxu0 0.0
  %234 = vmatpush1.msra.mxu0 %v34
  %235 = vmatprep.subr.mxu0 0.0
  %236 = vmatpush1.msra.mxu0 %v35
  %237 = vmatprep.subr.mxu0 0.0
  %238 = vmatpush1.msra.mxu0 %v36
  %239 = vmatprep.subr.mxu0 0.0
  %240 = vmatpush1.msra.mxu0 %v37
  %241 = vmatprep.subr.mxu0 0.0
  %242 = vmatpush1.msra.mxu0 %v38
  %243 = vmatprep.subr.mxu0 0.0
  %244 = vmatpush1.msra.mxu0 0.0
  %245 = vmatprep.subr.mxu0 0.0
  %246 = vmatpush1.msra.mxu0 0.0
  %247 = vmatprep.subr.mxu0 0.0
  %248 = vmatpush1.msra.mxu0 0.0
  %249 = vmatprep.subr.mxu0 0.0
  %250 = vmatpush1.msra.mxu0 0.0
  %251 = vmatprep.subr.mxu0 0.0
  %252 = vmatpush1.msra.mxu0 0.0
  %253 = vmatprep.subr.mxu0 0.0
  %254 = vmatpush1.msra.mxu0 0.0
  %255 = vmatprep.subr.mxu0 0.0
  %256 = vmatpush1.msra.mxu0 0.0
  %257 = vmatprep.subr.mxu0 0.0
  %258 = vmatpush1.msra.mxu0 0.0
  %259 = vmatprep.subr.mxu0 0.0
  %260 = vmatpush1.msra.mxu0 0.0
  %261 = vmatprep.subr.mxu0 0.0
  %262 = vmatpush1.msra.mxu0 0.0
  %263 = vmatprep.subr.mxu0 0.0
  %264 = vmatpush1.msra.mxu0 0.0
  %265 = vmatprep.subr.mxu0 0.0
  %266 = vmatpush1.msra.mxu0 0.0
  %267 = vmatprep.subr.mxu0 0.0
  %268 = vmatpush1.msra.mxu0 0.0
  %269 = vmatprep.subr.mxu0 0.0
  %270 = vmatpush1.msra.mxu0 0.0
  %271 = vmatprep.mubr.f32.mxu0 %v198
  %272 = vmatmul.mubr.f32.gmra.mrb[0].mxu0 %v13
  %v273 = vpop.f32.mrb[0].mxu0
  %v274 = vadd.f32 %v179, %v273
  %v275 = vpop.f32.mrb[0].mxu0
  %276 = vmatprep.mubr.f32.mxu0 %v200
  %277 = vmatmul.mubr.f32.gmra.mrb[0].mxu0 %v15
  %v278 = vpop.f32.mrb[0].mxu0
  %v279 = vadd.f32 %v184, %v278
  %v280 = vpop.f32.mrb[0].mxu0
  %281 = vmatprep.mubr.f32.mxu0 %v203
  %282 = vmatmul.mubr.f32.gmra.mrb[0].mxu0 %v17
  %v283 = vpop.f32.mrb[0].mxu0
  %v284 = vadd.f32 %v189, %v283
  %v285 = vpop.f32.mrb[0].mxu0
  %286 = vmatprep.mubr.f32.mxu0 %v205
  %287 = vmatmul.mubr.f32.gmra.mrb[0].mxu0 %v19
  %v288 = vpop.f32.mrb[0].mxu0
  %v289 = vadd.f32 %v194, %v288
  %v290 = vpop.f32.mrb[0].mxu0
  %291 = vdwg.mxu0
  %v292 = vld [vmem:[%s0] sm:$0xfc]
  %v293 = vld [vmem:[%s0 + $0x8] sm:$0xfc]
  %v294 = vld [vmem:[%s0 + $0x20] sm:$0x3]
  %v295 = vld [vmem:[%s0 + $0x28] sm:$0x3]
  %v296 = vld [vmem:[%s0 + $0x30] sm:$0xfc]
  %v297 = vld [vmem:[%s0 + $0x38] sm:$0xfc]
  %v298 = vld [vmem:[%s0 + $0x50] sm:$0x3]
  %v299 = vld [vmem:[%s0 + $0x58] sm:$0x3]
  %vm308 = vcmask 1045504
  %v309 = vrot.slane %v292, 2
  %v310 = vrot.slane %v15, 2
  %v311 = vsel %vm308, %v309, %v310
  %v312 = vrot.slane %v293, 2
  %v313 = vrot.slane %v16, 2
  %v314 = vsel %vm308, %v312, %v313
  %v315 = vrot.slane %v294, 2
  %v316 = vsel %vm308, %v310, %v315
  %v317 = vrot.slane %v295, 2
  %v318 = vsel %vm308, %v313, %v317
  %v319 = vrot.slane %v296, 2
  %v320 = vrot.slane %v19, 2
  %v321 = vsel %vm308, %v319, %v320
  %v322 = vrot.slane %v297, 2
  %v323 = vrot.slane %v20, 2
  %v324 = vsel %vm308, %v322, %v323
  %v325 = vrot.slane %v298, 2
  %v326 = vsel %vm308, %v320, %v325
  %v327 = vrot.slane %v299, 2
  %v328 = vsel %vm308, %v323, %v327
  %s333 = scalar_lea.vmem %s1, 288
  %v334 = vld [vmem:[%s333] sm:$0xff]
  %v335 = vld [vmem:[%s333 + $0x8] sm:$0xff]
  %v336 = vld [vmem:[%s333 + $0x10] sm:$0xff]
  %v337 = vld [vmem:[%s333 + $0x18] sm:$0xff]
  %v338 = vld [vmem:[%s333 + $0x20] sm:$0xff]
  %v339 = vld [vmem:[%s333 + $0x28] sm:$0xff]
  %v340 = vld [vmem:[%s333 + $0x30] sm:$0xff]
  %v341 = vld [vmem:[%s333 + $0x38] sm:$0xff]
  %v342 = vld [vmem:[%s333 + $0x40] sm:$0xff]
  %v343 = vld [vmem:[%s333 + $0x48] sm:$0xff]
  %v344 = vld [vmem:[%s333 + $0x50] sm:$0xff]
  %v345 = vld [vmem:[%s333 + $0x58] sm:$0xff]
  %v346 = vld [vmem:[%s333 + $0x60] sm:$0xff]
  %v347 = vld [vmem:[%s333 + $0x68] sm:$0xff]
  %v348 = vld [vmem:[%s333 + $0x70] sm:$0xff]
  %v349 = vld [vmem:[%s333 + $0x78] sm:$0xff]
  %v350 = vld [vmem:[%s333 + $0x80] sm:$0xff]
  %v351 = vld [vmem:[%s333 + $0x88] sm:$0xff]
  %v352 = vsel %vm103, %v314, 0
  %v354 = vsel %vm103, %v318, 0
  %v356 = vsel %vm103, %v324, 0
  %v358 = vsel %vm103, %v328, 0
  %360 = vmatprep.subr.mxu0 0.0
  %361 = vmatpush1.msra.mxu0 %v334
  %362 = vmatprep.subr.mxu0 0.0
  %363 = vmatpush1.msra.mxu0 %v335
  %364 = vmatprep.subr.mxu0 0.0
  %365 = vmatpush1.msra.mxu0 %v336
  %366 = vmatprep.subr.mxu0 0.0
  %367 = vmatpush1.msra.mxu0 %v337
  %368 = vmatprep.subr.mxu0 0.0
  %369 = vmatpush1.msra.mxu0 %v338
  %370 = vmatprep.subr.mxu0 0.0
  %371 = vmatpush1.msra.mxu0 %v339
  %372 = vmatprep.subr.mxu0 0.0
  %373 = vmatpush1.msra.mxu0 %v340
  %374 = vmatprep.subr.mxu0 0.0
  %375 = vmatpush1.msra.mxu0 %v341
  %376 = vmatprep.subr.mxu0 0.0
  %377 = vmatpush1.msra.mxu0 %v342
  %378 = vmatprep.subr.mxu0 0.0
  %379 = vmatpush1.msra.mxu0 %v343
  %380 = vmatprep.subr.mxu0 0.0
  %381 = vmatpush1.msra.mxu0 %v344
  %382 = vmatprep.subr.mxu0 0.0
  %383 = vmatpush1.msra.mxu0 %v345
  %384 = vmatprep.subr.mxu0 0.0
  %385 = vmatpush1.msra.mxu0 %v346
  %386 = vmatprep.subr.mxu0 0.0
  %387 = vmatpush1.msra.mxu0 %v347
  %388 = vmatprep.subr.mxu0 0.0
  %389 = vmatpush1.msra.mxu0 %v348
  %390 = vmatprep.subr.mxu0 0.0
  %391 = vmatpush1.msra.mxu0 %v349
  %392 = vmatprep.subr.mxu0 0.0
  %393 = vmatpush1.msra.mxu0 %v350
  %394 = vmatprep.subr.mxu0 0.0
  %395 = vmatpush1.msra.mxu0 %v351
  %396 = vmatprep.subr.mxu0 0.0
  %397 = vmatpush1.msra.mxu0 0.0
  %398 = vmatprep.subr.mxu0 0.0
  %399 = vmatpush1.msra.mxu0 0.0
  %400 = vmatprep.subr.mxu0 0.0
  %401 = vmatpush1.msra.mxu0 0.0
  %402 = vmatprep.subr.mxu0 0.0
  %403 = vmatpush1.msra.mxu0 0.0
  %404 = vmatprep.subr.mxu0 0.0
  %405 = vmatpush1.msra.mxu0 0.0
  %406 = vmatprep.subr.mxu0 0.0
  %407 = vmatpush1.msra.mxu0 0.0
  %408 = vmatprep.subr.mxu0 0.0
  %409 = vmatpush1.msra.mxu0 0.0
  %410 = vmatprep.subr.mxu0 0.0
  %411 = vmatpush1.msra.mxu0 0.0
  %412 = vmatprep.subr.mxu0 0.0
  %413 = vmatpush1.msra.mxu0 0.0
  %414 = vmatprep.subr.mxu0 0.0
  %415 = vmatpush1.msra.mxu0 0.0
  %416 = vmatprep.subr.mxu0 0.0
  %417 = vmatpush1.msra.mxu0 0.0
  %418 = vmatprep.subr.mxu0 0.0
  %419 = vmatpush1.msra.mxu0 0.0
  %420 = vmatprep.subr.mxu0 0.0
  %421 = vmatpush1.msra.mxu0 0.0
  %422 = vmatprep.subr.mxu0 0.0
  %423 = vmatpush1.msra.mxu0 0.0
  %424 = vmatprep.mubr.f32.mxu0 %v352
  %425 = vmatmul.mubr.f32.gmra.mrb[0].mxu0 %v311
  %v426 = vpop.f32.mrb[0].mxu0
  %v427 = vadd.f32 0.0, %v426
  %v428 = vpop.f32.mrb[0].mxu0
  %429 = vmatprep.mubr.f32.mxu0 %v354
  %430 = vmatmul.mubr.f32.gmra.mrb[0].mxu0 %v316
  %v431 = vpop.f32.mrb[0].mxu0
  %v432 = vadd.f32 0.0, %v431
  %v433 = vpop.f32.mrb[0].mxu0
  %434 = vmatprep.mubr.f32.mxu0 %v356
  %435 = vmatmul.mubr.f32.gmra.mrb[0].mxu0 %v321
  %v436 = vpop.f32.mrb[0].mxu0
  %v437 = vadd.f32 0.0, %v436
  %v438 = vpop.f32.mrb[0].mxu0
  %439 = vmatprep.mubr.f32.mxu0 %v358
  %440 = vmatmul.mubr.f32.gmra.mrb[0].mxu0 %v326
  %v441 = vpop.f32.mrb[0].mxu0
  %v442 = vadd.f32 0.0, %v441
  %v443 = vpop.f32.mrb[0].mxu0
  %444 = vdwg.mxu0
  %v445 = vadd.f32 %v274, %v427
  %v446 = vadd.f32 %v279, %v432
  %v447 = vadd.f32 %v284, %v437
  %v448 = vadd.f32 %v289, %v442
  %vm449 = vcmask 523264
  %450 = vst.msk [vmem:[%s2] sm:$0xff] %vm449, %v445
  %451 = vst.msk [vmem:[%s2 + $0x8] sm:$0xff] %vm449, %v446
  %452 = vst.msk [vmem:[%s2 + $0x10] sm:$0xff] %vm449, %v447
  %453 = vst.msk [vmem:[%s2 + $0x18] sm:$0xff] %vm449, %v448
  %v454 = vsel %vm449, %v445, 0.0
  %v455 = vsel %vm449, %v446, 0.0
  %v456 = vadd.f32 %v454, %v455
  %v457 = vsel %vm449, %v447, 0.0
  %v458 = vadd.f32 %v456, %v457
  %v459 = vsel %vm449, %v448, 0.0
  %v460 = vadd.f32 %v458, %v459
  %v461 = vrot.slane %v460, 4
  %v462 = vadd.f32 %v460, %v461
  %v463 = vrot.slane %v462, 2
  %v464 = vadd.f32 %v462, %v463
  %v465 = vrot.slane %v464, 1
  %v466 = vadd.f32 %v464, %v465
  %v467 = vmul.f32 %v445, %v445
  %v468 = vmul.f32 %v446, %v446
  %v469 = vmul.f32 %v447, %v447
  %v470 = vmul.f32 %v448, %v448
  %v471 = vsel %vm449, %v467, 0.0
  %v472 = vsel %vm449, %v468, 0.0
  %v473 = vadd.f32 %v471, %v472
  %v474 = vsel %vm449, %v469, 0.0
  %v475 = vadd.f32 %v473, %v474
  %v476 = vsel %vm449, %v470, 0.0
  %v477 = vadd.f32 %v475, %v476
  %v478 = vrot.slane %v477, 4
  %v479 = vadd.f32 %v477, %v478
  %v480 = vrot.slane %v479, 2
  %v481 = vadd.f32 %v479, %v480
  %v482 = vrot.slane %v481, 1
  %v483 = vadd.f32 %v481, %v482
  %vm484 = vcmask 1040384
  %v485 = vsel %vm484, %v466, %v483
  %vm486 = vcmask 517120
  %487 = vst.msk [vmem:[%s3] sm:$0x3] %vm486, %v485
  // Predicated region
  $region10: #{conv_block_cat.2} parent=0 // pred_check
    _
  $region11: #{conv_block_cat.2} parent=0 // pred_check_branch
    %489 = sbr.rel (0) target = $region13
  $region12: #{conv_block_cat.2} parent=0 // pred_region
    _
  $region13: #{conv_block_cat.2} parent=0 // pred_fallthru
    _
  // Predicated region
  $region14: #{conv_block_cat.2} parent=0 // pred_check
    _
  $region15: #{conv_block_cat.2} parent=0 // pred_check_branch
    %491 = sbr.rel (0) target = $region17
  $region16: #{conv_block_cat.2} parent=0 // pred_region
    _
  $region17: #{conv_block_cat.2} parent=0 // pred_fallthru
    _
  // Predicated region
  $region18: #{conv_block_cat.2} parent=0 // pred_check
    _
  $region19: #{conv_block_cat.2} parent=0 // pred_check_branch
    %493 = sbr.rel (0) target = $region21
  $region20: #{conv_block_cat.2} parent=0 // pred_region
    _
  $region21: #{conv_block_cat.2} parent=0 // pred_fallthru
    _
  // Predicated region
  $region22: #{conv_block_cat.2} parent=0 // pred_check
    _
  $region23: #{conv_block_cat.2} parent=0 // pred_check_branch
    %495 = sbr.rel (0) target = $region25
  $region24: #{conv_block_cat.2} parent=0 // pred_region
    _
  $region25: #{conv_block_cat.2} parent=0 // pred_fallthru
    _

</llo_original>
